<compile_context>
chip_gen: v5e
topology: v5e:2x2
jax: 0.10.0
libtpu: 0.0.40
codegen_flags: <defaults>
</compile_context>

<pallas_src>
import functools

import jax
import jax.numpy as jnp
from jax import lax
from jax.experimental import pallas as pl
from jax.experimental.pallas import tpu as pltpu


# ----------------------------- Pallas kernel --------------------------------

def fused_stem_kernel(p_ref, h_ref, w_ref, b_ref, o_ref, y_sc, rm_sc,
                      *, RC, OW, POW, CO):
    """One (batch, row-band) step of conv1 + BN(eval) + ReLU + maxpool(3x3,s2,p1).

    p_ref : (1, RC, OW, K)  bf16  im2col patches for conv rows [c*RC, c*RC+RC)
    h_ref : (1, 1,  OW, K)  bf16  patches of conv row c*RC-1 (halo; zeros for band 0)
    w_ref : (K, CO)         bf16  s2d conv weight with BN scale folded in
    b_ref : (1, CO)         f32   folded BN bias
    o_ref : (1, RC//2, POW, CO) f32  pooled rows [c*RC//2, (c+1)*RC//2)
    y_sc  : (RC+1, OW, CO)  f32   conv+ReLU rows incl. top halo row
    rm_sc : (RC//2, OW, CO) f32   row-pooled intermediate
    """
    c = pl.program_id(1)
    HALF = RC // 2
    K = w_ref.shape[0]

    w = w_ref[...]
    bias = b_ref[...]                                    # loaded once, reused below

    # ---- conv + folded BN + ReLU: one MXU matmul for the band's RC conv rows ----
    acc = jnp.dot(p_ref[...].reshape(RC * OW, K), w,
                  preferred_element_type=jnp.float32)
    y = jnp.maximum(acc + bias, 0.0)
    y_sc[pl.ds(1, RC), :, :] = y.reshape(RC, OW, CO)

    # ---- halo conv row (c*RC - 1), recomputed from its own (tiny) patch slab ----
    acc_h = jnp.dot(h_ref[...].reshape(OW, K), w,
                    preferred_element_type=jnp.float32)
    y_h = jnp.maximum(acc_h + bias, 0.0)
    # conv row -1 is zero padding; post-ReLU values are >= 0, so 0 acts as -inf.
    y_h = y_h * (c > 0).astype(jnp.float32)
    y_sc[pl.ds(0, 1), :, :] = y_h.reshape(1, OW, CO)

    # ---- fused 3x3/s2 max pool, separable: rows first ... ----
    rm_sc[...] = jnp.maximum(
        jnp.maximum(y_sc[pl.ds(0, HALF, 2), :, :], y_sc[pl.ds(1, HALF, 2), :, :]),
        y_sc[pl.ds(2, HALF, 2), :, :])

    # ... then columns.  Pooled col 0 is a 2-wide window (left zero pad dropped,
    # valid because ReLU output >= 0), so conv columns stay sublane-aligned at 0.
    if OW >= 2:
        out0 = jnp.maximum(rm_sc[:, pl.ds(0, 1), :], rm_sc[:, pl.ds(1, 1), :])
    else:
        out0 = rm_sc[:, pl.ds(0, 1), :]
    o_ref[0, :, pl.ds(0, 1), :] = out0.astype(o_ref.dtype)

    n3 = POW - 1 if OW % 2 == 0 else POW - 2             # full 3-wide windows
    if n3 > 0:
        mid = jnp.maximum(
            jnp.maximum(rm_sc[:, pl.ds(1, n3, 2), :], rm_sc[:, pl.ds(2, n3, 2), :]),
            rm_sc[:, pl.ds(3, n3, 2), :])
        o_ref[0, :, pl.ds(1, n3), :] = mid.astype(o_ref.dtype)
    if OW % 2 == 1 and POW >= 2:
        # odd OW: last pooled column is a 2-wide window (right zero pad dropped)
        last = jnp.maximum(rm_sc[:, pl.ds(OW - 2, 1), :], rm_sc[:, pl.ds(OW - 1, 1), :])
        o_ref[0, :, pl.ds(POW - 1, 1), :] = last.astype(o_ref.dtype)


# ------------------------------ forward pass --------------------------------

def thermal_module_forward(x_nchw, params):
    """Equivalent of thermal_module(share_net=1).forward(x): NCHW in / NCHW out."""
    w = params["conv1_w"]        # (Cout, Cin, 7, 7)  OIHW, like PyTorch
    scale = params["bn_scale"]   # (Cout,)
    bias = params["bn_bias"]     # (Cout,)

    N, C, H, W = x_nchw.shape
    Cout = w.shape[0]
    S, P = 2, 3
    OH = (H + 2 * P - 7) // S + 1
    OW = (W + 2 * P - 7) // S + 1
    POH = (OH + 2 * 1 - 3) // 2 + 1
    POW = (OW + 2 * 1 - 3) // 2 + 1

    CO = 128                             # lane-dense Cout (64 real + 64 zero lanes)
    QC = 4 * C                           # s2d channels (2x2 pixel block x Cin)
    QCP = max(16, -(-QC // 8) * 8)       # pad 12 -> 16 so K is a multiple of 128
    K = 16 * QCP                         # 4x4 s2d taps * QCP  (= 256 for Cin=3)

    # ---- row-band chunking: HALF pooled rows (RC = 2*HALF conv rows) per grid step ----
    TARGET_M = 2048                      # matmul rows per band (amortizes fixed costs)
    half0 = max(1, min(POH, TARGET_M // max(2 * OW, 1)))
    NC = -(-POH // half0)                # number of bands per image
    HALF = -(-POH // NC)                 # pooled rows per band (even load balance)
    RC = 2 * HALF                        # conv rows per band
    POH_PAD = NC * HALF
    ROWS_PAD = NC * RC

    # ---- input: NCHW -> NHWC, zero-pad by 3 (to even dims), space-to-depth, bf16 ----
    x = jnp.transpose(x_nchw, (0, 2, 3, 1)).astype(jnp.float32)     # (N, H, W, C)
    Hp, Wp = H + 2 * P, W + 2 * P
    xp = jnp.pad(x, ((0, 0), (P, P + Hp % 2), (P, P + Wp % 2), (0, 0)))
    Hs, Ws = (Hp + Hp % 2) // 2, (Wp + Wp % 2) // 2                 # = OH+3, OW+3
    xs = (xp.reshape(N, Hs, 2, Ws, 2, C)
            .transpose(0, 1, 3, 2, 4, 5)
            .reshape(N, Hs, Ws, QC))
    xs = jnp.pad(xs, ((0, 0), (0, 0), (0, 0), (0, QCP - QC))).astype(jnp.bfloat16)

    # ---- im2col hoisted to the wrapper: 16 shifted views of the compact s2d input ----
    taps = [xs[:, r:r + OH, c:c + OW, :] for r in range(4) for c in range(4)]
    patches = jnp.concatenate(taps, axis=-1)                        # (N, OH, OW, K)
    # edge-pad conv rows to a whole number of bands: duplicated rows are >= 0 and
    # idempotent under the max pool, so they never change a pooled value.
    patches = jnp.pad(patches, ((0, 0), (0, ROWS_PAD - OH), (0, 0), (0, 0)),
                      mode="edge")

    # one-conv-row halo per band (previous band's last conv row; zeros for band 0)
    zero_row = jnp.zeros((N, 1, OW, K), patches.dtype)
    if NC > 1:
        halo_rows = patches[:, RC - 1:(NC - 1) * RC:RC]             # (N, NC-1, OW, K)
        halo = jnp.concatenate([zero_row, halo_rows], axis=1)       # (N, NC, OW, K)
    else:
        halo = zero_row

    # ---- weights: OIHW -> s2d taps, fold BN scale, pad to (K, 128), bf16 ----
    w8 = jnp.pad(w.astype(jnp.float32), ((0, 0), (0, 0), (0, 1), (0, 1)))   # 7x7 -> 8x8
    wq = (w8.reshape(Cout, C, 4, 2, 4, 2)
            .transpose(2, 4, 3, 5, 1, 0)          # (r, c, dy, dx, ci, co)
            .reshape(4, 4, QC, Cout))
    wq = jnp.pad(wq, ((0, 0), (0, 0), (0, QCP - QC), (0, 0)))
    Wm = wq.reshape(K, Cout) * scale[None, :]                      # fold BN scale
    Wm = jnp.pad(Wm, ((0, 0), (0, CO - Cout))).astype(jnp.bfloat16)
    bvec = jnp.pad(bias.astype(jnp.float32), (0, CO - Cout)).reshape(1, CO)

    kernel = functools.partial(fused_stem_kernel, RC=RC, OW=OW, POW=POW, CO=CO)

    pooled = pl.pallas_call(
        kernel,
        out_shape=jax.ShapeDtypeStruct((N, POH_PAD, POW, CO), jnp.float32),
        grid_spec=pltpu.PrefetchScalarGridSpec(
            num_scalar_prefetch=0,
            grid=(N, NC),                          # both axes fully independent
            in_specs=[
                pl.BlockSpec((1, RC, OW, K), lambda n, c: (n, c, 0, 0)),
                pl.BlockSpec((1, 1, OW, K), lambda n, c: (n, c, 0, 0)),
                pl.BlockSpec((K, CO), lambda n, c: (0, 0)),
                pl.BlockSpec((1, CO), lambda n, c: (0, 0)),
            ],
            out_specs=pl.BlockSpec((1, HALF, POW, CO), lambda n, c: (n, c, 0, 0)),
            scratch_shapes=[
                pltpu.VMEM((RC + 1, OW, CO), jnp.float32),   # conv+relu rows (+halo)
                pltpu.VMEM((HALF, OW, CO), jnp.float32),     # row-pooled intermediate
            ],
        ),
        compiler_params=pltpu.CompilerParams(
            dimension_semantics=("parallel", "parallel"),
            vmem_limit_bytes=32 * 1024 * 1024,     # explicit budget, fits v5e/v6e/v7x
        ),
    )(patches, halo, Wm, bvec)

    out = pooled[:, :POH, :, :Cout]                # drop pooled-row / lane padding
    return jnp.transpose(out, (0, 3, 1, 2))        # back to NCHW


# ------------------------- parameters (deterministic) -----------------------

def make_params(key):
    cout, cin = 64, 3
    conv1_w = 0.05 * jax.random.normal(key, (cout, cin, 7, 7), jnp.float32)
    c = jnp.arange(cout, dtype=jnp.float32)
    gamma = 1.0 + 0.01 * c
    beta = 0.02 * (c - 32.0)
    running_mean = 0.1 * jnp.sin(c)
    running_var = 1.0 + 0.05 * c
    eps = 1e-5
    bn_scale = gamma / jnp.sqrt(running_var + eps)       # fold BN (eval mode)
    bn_bias = beta - running_mean * bn_scale
    return {"conv1_w": conv1_w, "bn_scale": bn_scale, "bn_bias": bn_bias}


# ------------------------------- reference ----------------------------------

def reference(x_nchw, params):
    w, scale, bias = params["conv1_w"], params["bn_scale"], params["bn_bias"]
    y = lax.conv_general_dilated(
        x_nchw, w, window_strides=(2, 2), padding=((3, 3), (3, 3)),
        dimension_numbers=("NCHW", "OIHW", "NCHW"))
    y = y * scale[None, :, None, None] + bias[None, :, None, None]
    y = jnp.maximum(y, 0.0)
    y = lax.reduce_window(y, -jnp.inf, lax.max,
                          window_dimensions=(1, 1, 3, 3),
                          window_strides=(1, 1, 2, 2),
                          padding=((0, 0), (0, 0), (1, 1), (1, 1)))
    return y


# ---------------------------------- main -------------------------------------

if __name__ == "__main__":
    key = jax.random.PRNGKey(0)
    kx, kw = jax.random.split(key)

    # small-but-consistent shapes: batch=2, 3 input channels, 32x32 spatial
    x = jax.random.normal(kx, (2, 3, 32, 32), jnp.float32)
    params = make_params(kw)

    out = jax.jit(thermal_module_forward)(x, params)
    out = jax.block_until_ready(out)

    assert out.shape == (2, 64, 8, 8), out.shape

    ref = jax.block_until_ready(reference(x, params))
    err = float(jnp.max(jnp.abs(out - ref)))
    assert err < 2e-2, f"max abs err {err}"

    print("KERNEL_OK")
</pallas_src>

<mosaic_0001>
module attributes {stable_mosaic.version = 11 : i64} {
  func.func @fused_stem_kernel(%arg0: i32, %arg1: i32, %arg2: memref<1x16x16x256xbf16, #tpu.memory_space<vmem>>, %arg3: memref<1x1x16x256xbf16, #tpu.memory_space<vmem>>, %arg4: memref<256x128xbf16, #tpu.memory_space<vmem>>, %arg5: memref<1x128xf32, #tpu.memory_space<vmem>>, %arg6: memref<1x8x8x128xf32, #tpu.memory_space<vmem>>, %arg7: memref<17x16x128xf32, #tpu.memory_space<vmem>>, %arg8: memref<8x16x128xf32, #tpu.memory_space<vmem>>) attributes {dimension_semantics = [#tpu.dimension_semantics<parallel>, #tpu.dimension_semantics<parallel>], iteration_bounds = array<i64: 2, 1>, scalar_prefetch = 0 : i64, scratch_operands = 2 : i64, tpu.core_type = #tpu.core_type<tc>, window_params = [{transform_indices = @transform_0, window_bounds = array<i64: 1, 16, 16, 256>}, {transform_indices = @transform_1, window_bounds = array<i64: 1, 1, 16, 256>}, {pipeline_mode = #tpu.pipeline_mode<synchronous>, transform_indices = @transform_2, window_bounds = array<i64: 256, 128>}, {pipeline_mode = #tpu.pipeline_mode<synchronous>, transform_indices = @transform_3, window_bounds = array<i64: 1, 128>}, {transform_indices = @transform_4, window_bounds = array<i64: 1, 8, 8, 128>}]} {
    %c0 = arith.constant 0 : index
    %c0_0 = arith.constant 0 : index
    %0 = vector.load %arg4[%c0, %c0_0] : memref<256x128xbf16, #tpu.memory_space<vmem>>, vector<256x128xbf16>
    %c0_1 = arith.constant 0 : index
    %c0_2 = arith.constant 0 : index
    %1 = vector.load %arg5[%c0_1, %c0_2] : memref<1x128xf32, #tpu.memory_space<vmem>>, vector<1x128xf32>
    %c0_3 = arith.constant 0 : index
    %c0_4 = arith.constant 0 : index
    %c0_5 = arith.constant 0 : index
    %c0_6 = arith.constant 0 : index
    %2 = vector.load %arg2[%c0_3, %c0_4, %c0_5, %c0_6] : memref<1x16x16x256xbf16, #tpu.memory_space<vmem>>, vector<1x16x16x256xbf16>
    %3 = vector.shape_cast %2 : vector<1x16x16x256xbf16> to vector<256x256xbf16>
    %cst = arith.constant dense<0.000000e+00> : vector<256x128xf32>
    %4 = tpu.matmul %3, %0, %cst {dimension_numbers = #tpu.dot_dimension_numbers<[1], [0], [0], [1], [0, 0, 1, 1], [], []>} : vector<256x256xbf16>, vector<256x128xbf16>, vector<256x128xf32> -> vector<256x128xf32>
    %5 = vector.broadcast %1 : vector<1x128xf32> to vector<256x128xf32>
    %6 = arith.addf %4, %5 : vector<256x128xf32>
    %cst_7 = arith.constant 0.000000e+00 : f32
    %7 = vector.broadcast %cst_7 : f32 to vector<256x128xf32>
    %8 = arith.maximumf %6, %7 : vector<256x128xf32>
    %9 = vector.shape_cast %8 : vector<256x128xf32> to vector<16x16x128xf32>
    %c1 = arith.constant 1 : index
    %c0_8 = arith.constant 0 : index
    %c0_9 = arith.constant 0 : index
    %10 = vector.load %arg7[%c1, %c0_8, %c0_9] : memref<17x16x128xf32, #tpu.memory_space<vmem>>, vector<16x16x128xf32>
    tpu.vector_store %arg7[%c1, %c0_8, %c0_9], %9 {strides = array<i32>} : memref<17x16x128xf32, #tpu.memory_space<vmem>>, vector<16x16x128xf32>,
    %c0_10 = arith.constant 0 : index
    %c0_11 = arith.constant 0 : index
    %c0_12 = arith.constant 0 : index
    %c0_13 = arith.constant 0 : index
    %11 = vector.load %arg3[%c0_10, %c0_11, %c0_12, %c0_13] : memref<1x1x16x256xbf16, #tpu.memory_space<vmem>>, vector<1x1x16x256xbf16>
    %12 = vector.shape_cast %11 : vector<1x1x16x256xbf16> to vector<16x256xbf16>
    %cst_14 = arith.constant dense<0.000000e+00> : vector<16x128xf32>
    %13 = tpu.matmul %12, %0, %cst_14 {dimension_numbers = #tpu.dot_dimension_numbers<[1], [0], [0], [1], [0, 0, 1, 1], [], []>} : vector<16x256xbf16>, vector<256x128xbf16>, vector<16x128xf32> -> vector<16x128xf32>
    %14 = vector.broadcast %1 : vector<1x128xf32> to vector<16x128xf32>
    %15 = arith.addf %13, %14 : vector<16x128xf32>
    %cst_15 = arith.constant 0.000000e+00 : f32
    %16 = vector.broadcast %cst_15 : f32 to vector<16x128xf32>
    %17 = arith.maximumf %15, %16 : vector<16x128xf32>
    %c0_i32 = arith.constant 0 : i32
    %18 = arith.cmpi sgt, %arg1, %c0_i32 : i32
    %19 = arith.extui %18 : i1 to i32
    %20 = arith.sitofp %19 : i32 to f32
    %21 = vector.broadcast %20 : f32 to vector<16x128xf32>
    %22 = arith.mulf %17, %21 : vector<16x128xf32>
    %23 = vector.shape_cast %22 : vector<16x128xf32> to vector<1x16x128xf32>
    %c0_16 = arith.constant 0 : index
    %c0_17 = arith.constant 0 : index
    %c0_18 = arith.constant 0 : index
    %24 = vector.load %arg7[%c0_16, %c0_17, %c0_18] : memref<17x16x128xf32, #tpu.memory_space<vmem>>, vector<1x16x128xf32>
    tpu.vector_store %arg7[%c0_16, %c0_17, %c0_18], %23 {strides = array<i32>} : memref<17x16x128xf32, #tpu.memory_space<vmem>>, vector<1x16x128xf32>,
    %c0_19 = arith.constant 0 : index
    %c0_20 = arith.constant 0 : index
    %c0_21 = arith.constant 0 : index
    %25 = tpu.strided_load %arg7[%c0_19, %c0_20, %c0_21] {strides = array<i32: 2, 1, 1>} : memref<17x16x128xf32, #tpu.memory_space<vmem>>, vector<8x16x128xf32>
    %c1_22 = arith.constant 1 : index
    %c0_23 = arith.constant 0 : index
    %c0_24 = arith.constant 0 : index
    %26 = tpu.strided_load %arg7[%c1_22, %c0_23, %c0_24] {strides = array<i32: 2, 1, 1>} : memref<17x16x128xf32, #tpu.memory_space<vmem>>, vector<8x16x128xf32>
    %27 = arith.maximumf %25, %26 : vector<8x16x128xf32>
    %c2 = arith.constant 2 : index
    %c0_25 = arith.constant 0 : index
    %c0_26 = arith.constant 0 : index
    %28 = tpu.strided_load %arg7[%c2, %c0_25, %c0_26] {strides = array<i32: 2, 1, 1>} : memref<17x16x128xf32, #tpu.memory_space<vmem>>, vector<8x16x128xf32>
    %29 = arith.maximumf %27, %28 : vector<8x16x128xf32>
    %c0_27 = arith.constant 0 : index
    %c0_28 = arith.constant 0 : index
    %c0_29 = arith.constant 0 : index
    %30 = vector.load %arg8[%c0_27, %c0_28, %c0_29] : memref<8x16x128xf32, #tpu.memory_space<vmem>>, vector<8x16x128xf32>
    tpu.vector_store %arg8[%c0_27, %c0_28, %c0_29], %29 {strides = array<i32>} : memref<8x16x128xf32, #tpu.memory_space<vmem>>, vector<8x16x128xf32>,
    %c0_30 = arith.constant 0 : index
    %c0_31 = arith.constant 0 : index
    %c0_32 = arith.constant 0 : index
    %31 = vector.load %arg8[%c0_30, %c0_31, %c0_32] : memref<8x16x128xf32, #tpu.memory_space<vmem>>, vector<8x1x128xf32>
    %c0_33 = arith.constant 0 : index
    %c1_34 = arith.constant 1 : index
    %c0_35 = arith.constant 0 : index
    %32 = vector.load %arg8[%c0_33, %c1_34, %c0_35] : memref<8x16x128xf32, #tpu.memory_space<vmem>>, vector<8x1x128xf32>
    %33 = arith.maximumf %31, %32 : vector<8x1x128xf32>
    %c0_36 = arith.constant 0 : index
    %c0_37 = arith.constant 0 : index
    %c0_38 = arith.constant 0 : index
    %c0_39 = arith.constant 0 : index
    %34 = vector.load %arg6[%c0_36, %c0_37, %c0_38, %c0_39] : memref<1x8x8x128xf32, #tpu.memory_space<vmem>>, vector<1x8x1x128xf32>
    %35 = vector.shape_cast %34 : vector<1x8x1x128xf32> to vector<8x1x128xf32>
    %36 = vector.shape_cast %33 : vector<8x1x128xf32> to vector<1x8x1x128xf32>
    tpu.vector_store %arg6[%c0_36, %c0_37, %c0_38, %c0_39], %36 {strides = array<i32>} : memref<1x8x8x128xf32, #tpu.memory_space<vmem>>, vector<1x8x1x128xf32>,
    %c0_40 = arith.constant 0 : index
    %c1_41 = arith.constant 1 : index
    %c0_42 = arith.constant 0 : index
    %37 = tpu.strided_load %arg8[%c0_40, %c1_41, %c0_42] {strides = array<i32: 1, 2, 1>} : memref<8x16x128xf32, #tpu.memory_space<vmem>>, vector<8x7x128xf32>
    %c0_43 = arith.constant 0 : index
    %c2_44 = arith.constant 2 : index
    %c0_45 = arith.constant 0 : index
    %38 = tpu.strided_load %arg8[%c0_43, %c2_44, %c0_45] {strides = array<i32: 1, 2, 1>} : memref<8x16x128xf32, #tpu.memory_space<vmem>>, vector<8x7x128xf32>
    %39 = arith.maximumf %37, %38 : vector<8x7x128xf32>
    %c0_46 = arith.constant 0 : index
    %c3 = arith.constant 3 : index
    %c0_47 = arith.constant 0 : index
    %40 = tpu.strided_load %arg8[%c0_46, %c3, %c0_47] {strides = array<i32: 1, 2, 1>} : memref<8x16x128xf32, #tpu.memory_space<vmem>>, vector<8x7x128xf32>
    %41 = arith.maximumf %39, %40 : vector<8x7x128xf32>
    %c0_48 = arith.constant 0 : index
    %c0_49 = arith.constant 0 : index
    %c1_50 = arith.constant 1 : index
    %c0_51 = arith.constant 0 : index
    %42 = vector.load %arg6[%c0_48, %c0_49, %c1_50, %c0_51] : memref<1x8x8x128xf32, #tpu.memory_space<vmem>>, vector<1x8x7x128xf32>
    %43 = vector.shape_cast %42 : vector<1x8x7x128xf32> to vector<8x7x128xf32>
    %44 = vector.shape_cast %41 : vector<8x7x128xf32> to vector<1x8x7x128xf32>
    tpu.vector_store %arg6[%c0_48, %c0_49, %c1_50, %c0_51], %44 {strides = array<i32>} : memref<1x8x8x128xf32, #tpu.memory_space<vmem>>, vector<1x8x7x128xf32>,
    return
  }
  func.func @transform_0(%arg0: i32, %arg1: i32) -> (i32, i32, i32, i32) {
    %c0_i32 = arith.constant 0 : i32
    %c0_i32_0 = arith.constant 0 : i32
    %c0_i32_1 = arith.constant 0 : i32
    return %arg0, %arg1, %c0_i32, %c0_i32_0 : i32, i32, i32, i32
  }
  func.func @transform_1(%arg0: i32, %arg1: i32) -> (i32, i32, i32, i32) {
    %c0_i32 = arith.constant 0 : i32
    %c0_i32_0 = arith.constant 0 : i32
    %c0_i32_1 = arith.constant 0 : i32
    return %arg0, %arg1, %c0_i32, %c0_i32_0 : i32, i32, i32, i32
  }
  func.func @transform_2(%arg0: i32, %arg1: i32) -> (i32, i32) {
    %c0_i32 = arith.constant 0 : i32
    %c0_i32_0 = arith.constant 0 : i32
    %c0_i32_1 = arith.constant 0 : i32
    return %c0_i32, %c0_i32_0 : i32, i32
  }
  func.func @transform_3(%arg0: i32, %arg1: i32) -> (i32, i32) {
    %c0_i32 = arith.constant 0 : i32
    %c0_i32_0 = arith.constant 0 : i32
    %c0_i32_1 = arith.constant 0 : i32
    return %c0_i32, %c0_i32_0 : i32, i32
  }
  func.func @transform_4(%arg0: i32, %arg1: i32) -> (i32, i32, i32, i32) {
    %c0_i32 = arith.constant 0 : i32
    %c0_i32_0 = arith.constant 0 : i32
    %c0_i32_1 = arith.constant 0 : i32
    return %arg0, %arg1, %c0_i32, %c0_i32_0 : i32, i32, i32, i32
  }
}

</mosaic_0001>

<llo_original>
// kernel: thermal_module_forward.1
$region0: #{thermal_module_forward.1}
  #allocation0 [shape = 'u32[]', space=smem, size = 0x4, offset = 0x4, fixed_abs, tag = 'smem constant byte address 0x4 - core index']
  #allocation1 [shape = 'u32[72,128]{1,0:T(1,128)}', space=vmem, size = 0x9000, scoped, tag = 'internal scratch']
  #allocation2 [shape = 'f32[17,16,128]{2,1,0:T(8,128)}', space=vmem, size = 0x22000, scoped, tag = 'scratch operand']
  #allocation3 [shape = 'f32[8,16,128]{2,1,0:T(8,128)}', space=vmem, size = 0x10000, scoped, tag = 'scratch operand']
  %s0 = inlined_call_operand.vmem [shape: bf16[2,16,16,256], index: 0, kind: input, shape index: {}]
  %s1 = inlined_call_operand.vmem [shape: bf16[2,1,16,256], index: 1, kind: input, shape index: {}]
  %s2 = inlined_call_operand.vmem [shape: bf16[256,128], index: 2, kind: input, shape index: {}]
  %s3 = inlined_call_operand.vmem [shape: f32[1,128], index: 3, kind: input, shape index: {}]
  %s4 = inlined_call_operand.vmem [shape: f32[2,8,8,128], index: 4, kind: output, shape index: {}]
  %s5 = sld [smem:[#allocation0]]
  $region49: #{thermal_module_forward.1} parent=0
    _
  %s7 = ssub.s32 1, %s5
  %s8 = scalar_select 0, %s7, %s5
  loop: start=0, step=1, limit=4
  $region2: #{thermal_module_forward.1} parent=0 // loop_pre_header
    _
  $region3: #{thermal_module_forward.1} parent=0 // loop_header
    %s10 = sphi 0, %s14
    %p11 = scmp.ge.s32.totalorder %s10, 4
    %s17 = sphi 0, %s29
    %s18 = sphi 0, %s25
    %s19 = sphi 0, %s17
    %s20 = sphi 0, %s18
    %s21 = sphi 0, %s19
    %s22 = sphi 0, %s20
    %s34 = sphi 0, %s36
    %s37 = sphi 0, %s34
    %s38 = sphi 0, %s37
    %s54 = sphi 0, %s38
    %s62 = sphi 0, %s64
    %s65 = sphi 0, %s62
    %s66 = sphi 0, %s65
    %s82 = sphi 0, %s66
    %s86 = sphi 0, %s86
    %s88 = sphi 0, %s86
    %s89 = sphi 0, %s88
    %s103 = sphi 0, %s89
    %s107 = sphi 0, %s107
    %s109 = sphi 0, %s107
    %s110 = sphi 0, %s109
    %s124 = sphi 0, %s110
    %s132 = sphi 0, %s134
    %s135 = sphi 0, %s132
    %s136 = sphi 0, %s135
    %s152 = sphi 0, %s136
  $region4: #{thermal_module_forward.1} parent=0 // loop_header_branch
    %13 = sbr.rel (%p11) target = $region8
  $region5: #{thermal_module_forward.1} parent=0 // loop_body
    %s15 = ssub.s32 %s10, 1
    %s16 = ssub.s32 %s10, 2
    %s23 = sadd.s32 1, %s18
    %p24 = scmp.ge.s32.totalorder %s23, 1
    %s25 = scalar_select %p24, 0, %s23
    %s26 = sadd.s32 1, %s17
    %s27 = scalar_select %p24, %s26, %s17
    %p28 = scmp.ge.s32.totalorder %s27, 2
    %s29 = scalar_select %p28, 0, %s27
    %s30 = ssub.s32 %s17, %s29
    %s31 = ssub.s32 %s18, %s25
    %s32 = sor.u32 %s30, %s31
    %p33 = scmp.eq.s32.totalorder %s32, 0
    %s35 = sadd.s32 %s34, 1
    %s36 = scalar_select %p33, %s34, %s35
    %p39 = pneg %p33
    %p40 = scmp.eq.s32.totalorder %s10, 1
    %p41 = por %p39, %p40
    %p42 = scmp.ne.s32.totalorder %s34, %s37
    %p43 = scmp.eq.s32.totalorder %s10, 0
    %p44 = por %p42, %p43
    %p45 = scmp.ne.s32.totalorder %s34, %s37
    %p46 = scmp.eq.s32.totalorder %s15, 1
    %p47 = por %p45, %p46
    %p48 = scmp.ne.s32.totalorder %s37, %s38
    %p49 = scmp.eq.s32.totalorder %s15, 0
    %p50 = por %p48, %p49
    %p51 = scmp.ne.s32.totalorder %s37, %s38
    %p52 = scmp.eq.s32.totalorder %s16, 1
    %p53 = por %p51, %p52
    %p55 = scmp.ne.s32.totalorder %s38, %s54
    %p56 = scmp.eq.s32.totalorder %s16, 0
    %p57 = por %p55, %p56
    %s58 = ssub.s32 %s17, %s29
    %s59 = ssub.s32 %s18, %s25
    %s60 = sor.u32 %s58, %s59
    %p61 = scmp.eq.s32.totalorder %s60, 0
    %s63 = sadd.s32 %s62, 1
    %s64 = scalar_select %p61, %s62, %s63
    %p67 = pneg %p61
    %p68 = scmp.eq.s32.totalorder %s10, 1
    %p69 = por %p67, %p68
    %p70 = scmp.ne.s32.totalorder %s62, %s65
    %p71 = scmp.eq.s32.totalorder %s10, 0
    %p72 = por %p70, %p71
    %p73 = scmp.ne.s32.totalorder %s62, %s65
    %p74 = scmp.eq.s32.totalorder %s15, 1
    %p75 = por %p73, %p74
    %p76 = scmp.ne.s32.totalorder %s65, %s66
    %p77 = scmp.eq.s32.totalorder %s15, 0
    %p78 = por %p76, %p77
    %p79 = scmp.ne.s32.totalorder %s65, %s66
    %p80 = scmp.eq.s32.totalorder %s16, 1
    %p81 = por %p79, %p80
    %p83 = scmp.ne.s32.totalorder %s66, %s82
    %p84 = scmp.eq.s32.totalorder %s16, 0
    %p85 = por %p83, %p84
    %s87 = sadd.s32 %s86, 1
    %p90 = scmp.eq.s32.totalorder %s10, 1
    %p91 = scmp.ne.s32.totalorder %s86, %s88
    %p92 = scmp.eq.s32.totalorder %s10, 0
    %p93 = por %p91, %p92
    %p94 = scmp.ne.s32.totalorder %s86, %s88
    %p95 = scmp.eq.s32.totalorder %s15, 1
    %p96 = por %p94, %p95
    %p97 = scmp.ne.s32.totalorder %s88, %s89
    %p98 = scmp.eq.s32.totalorder %s15, 0
    %p99 = por %p97, %p98
    %p100 = scmp.ne.s32.totalorder %s88, %s89
    %p101 = scmp.eq.s32.totalorder %s16, 1
    %p102 = por %p100, %p101
    %p104 = scmp.ne.s32.totalorder %s89, %s103
    %p105 = scmp.eq.s32.totalorder %s16, 0
    %p106 = por %p104, %p105
    %s108 = sadd.s32 %s107, 1
    %p111 = scmp.eq.s32.totalorder %s10, 1
    %p112 = scmp.ne.s32.totalorder %s107, %s109
    %p113 = scmp.eq.s32.totalorder %s10, 0
    %p114 = por %p112, %p113
    %p115 = scmp.ne.s32.totalorder %s107, %s109
    %p116 = scmp.eq.s32.totalorder %s15, 1
    %p117 = por %p115, %p116
    %p118 = scmp.ne.s32.totalorder %s109, %s110
    %p119 = scmp.eq.s32.totalorder %s15, 0
    %p120 = por %p118, %p119
    %p121 = scmp.ne.s32.totalorder %s109, %s110
    %p122 = scmp.eq.s32.totalorder %s16, 1
    %p123 = por %p121, %p122
    %p125 = scmp.ne.s32.totalorder %s110, %s124
    %p126 = scmp.eq.s32.totalorder %s16, 0
    %p127 = por %p125, %p126
    %s128 = ssub.s32 %s17, %s29
    %s129 = ssub.s32 %s18, %s25
    %s130 = sor.u32 %s128, %s129
    %p131 = scmp.eq.s32.totalorder %s130, 0
    %s133 = sadd.s32 %s132, 1
    %s134 = scalar_select %p131, %s132, %s133
    %p137 = pneg %p131
    %p138 = scmp.eq.s32.totalorder %s10, 1
    %p139 = por %p137, %p138
    %p140 = scmp.ne.s32.totalorder %s132, %s135
    %p141 = scmp.eq.s32.totalorder %s10, 0
    %p142 = por %p140, %p141
    %p143 = scmp.ne.s32.totalorder %s132, %s135
    %p144 = scmp.eq.s32.totalorder %s15, 1
    %p145 = por %p143, %p144
    %p146 = scmp.ne.s32.totalorder %s135, %s136
    %p147 = scmp.eq.s32.totalorder %s15, 0
    %p148 = por %p146, %p147
    %p149 = scmp.ne.s32.totalorder %s135, %s136
    %p150 = scmp.eq.s32.totalorder %s16, 1
    %p151 = por %p149, %p150
    %p153 = scmp.ne.s32.totalorder %s136, %s152
    %p154 = scmp.eq.s32.totalorder %s16, 0
    %p155 = por %p153, %p154
    %p156 = scmp.le.s32.totalorder 1, %s10
    %p157 = scmp.lt.s32.totalorder %s10, 3
    %p158 = pnand %p156, %p157
    %p159 = pneg %p158
    // Predicated region
    $region9: #{thermal_module_forward.1} parent=5 // pred_check
      _
    $region10: #{thermal_module_forward.1} parent=5 // pred_check_branch
      %161 = sbr.rel (%p158) target = $region12
    $region11: #{thermal_module_forward.1} parent=5 // pred_region
      %s162 = ssub.s32 %s10, 1
      // Predicated region
      $region13: #{thermal_module_forward.1} parent=11 // pred_check
        %p163 = pneg %p99
      $region14: #{thermal_module_forward.1} parent=11 // pred_check_branch
        %165 = sbr.rel (%p163) target = $region16
      $region15: #{thermal_module_forward.1} parent=11 // pred_region
        _
      $region16: #{thermal_module_forward.1} parent=11 // pred_fallthru
        _
      // Predicated region
      $region17: #{thermal_module_forward.1} parent=11 // pred_check
        %p166 = pneg %p120
      $region18: #{thermal_module_forward.1} parent=11 // pred_check_branch
        %168 = sbr.rel (%p166) target = $region20
      $region19: #{thermal_module_forward.1} parent=11 // pred_region
        _
      $region20: #{thermal_module_forward.1} parent=11 // pred_fallthru
        _
    $region12: #{thermal_module_forward.1} parent=5 // pred_fallthru
      _
    %p169 = scmp.lt.s32.totalorder %s10, 2
    // Predicated region
    $region21: #{thermal_module_forward.1} parent=5 // pred_check
      %p170 = pneg %p169
    $region22: #{thermal_module_forward.1} parent=5 // pred_check_branch
      %172 = sbr.rel (%p170) target = $region24
    $region23: #{thermal_module_forward.1} parent=5 // pred_region
      // Predicated region
      $region25: #{thermal_module_forward.1} parent=23 // pred_check
        %p173 = pneg %p44
      $region26: #{thermal_module_forward.1} parent=23 // pred_check_branch
        %175 = sbr.rel (%p173) target = $region28
      $region27: #{thermal_module_forward.1} parent=23 // pred_region
        %s176 = smul.u32 16, %s18
        %p177 = scmp.lt.s32.totalorder %s17, 1
        %s178 = scalar_select %p177, %s17, 1
        %p179 = scmp.lt.s32.totalorder %s176, 15
        %s180 = scalar_select %p179, %s176, 15
        %s181 = smul.addr %s180, 4
        %s182 = smul.addr %s178, 64
        %s183 = sadd.s32 %s181, %s182
        %s184 = smul.addr %s183, 4
        %s185 = scalar_lea.vmem %s0, %s184
        %s186 = smul.u32 16, %s18
      $region28: #{thermal_module_forward.1} parent=23 // pred_fallthru
        _
      // Predicated region
      $region29: #{thermal_module_forward.1} parent=23 // pred_check
        %p187 = pneg %p72
      $region30: #{thermal_module_forward.1} parent=23 // pred_check_branch
        %189 = sbr.rel (%p187) target = $region32
      $region31: #{thermal_module_forward.1} parent=23 // pred_region
        %p190 = scmp.lt.s32.totalorder %s17, 1
        %s191 = scalar_select %p190, %s17, 1
        %p192 = scmp.lt.s32.totalorder %s18, 0
        %s193 = scalar_select %p192, %s18, 0
        %s194 = smul.addr %s193, 4
        %s195 = smul.addr %s191, 4
        %s196 = sadd.s32 %s194, %s195
        %s197 = smul.addr %s196, 4
        %s198 = scalar_lea.vmem %s1, %s197
      $region32: #{thermal_module_forward.1} parent=23 // pred_fallthru
        _
    $region24: #{thermal_module_forward.1} parent=5 // pred_fallthru
      _
    %p199 = scmp.le.s32.totalorder 1, %s10
    %p200 = scmp.lt.s32.totalorder %s10, 3
    %p201 = pnand %p199, %p200
    %p202 = pneg %p201
    // Predicated region
    $region33: #{thermal_module_forward.1} parent=5 // pred_check
      _
    $region34: #{thermal_module_forward.1} parent=5 // pred_check_branch
      %204 = sbr.rel (%p201) target = $region36
    $region35: #{thermal_module_forward.1} parent=5 // pred_region
      %s205 = ssub.s32 %s10, 1
      %s206 = smul.u32 16, %s20
      %p207 = scmp.lt.s32.totalorder %s19, 1
      %s208 = scalar_select %p207, %s19, 1
      %p209 = scmp.lt.s32.totalorder %s206, 15
      %s210 = scalar_select %p209, %s206, 15
      %s211 = smul.addr %s210, 4
      %s212 = smul.addr %s208, 64
      %s213 = sadd.s32 %s211, %s212
      %s214 = smul.addr %s213, 4
      %s215 = scalar_lea.vmem %s0, %s214
      %p216 = pneg %p50
      %p217 = pneg %p47
      %p218 = scmp.lt.s32.totalorder %s19, 1
      %s219 = scalar_select %p218, %s19, 1
      %p220 = scmp.lt.s32.totalorder %s20, 0
      %s221 = scalar_select %p220, %s20, 0
      %s222 = smul.addr %s221, 4
      %s223 = smul.addr %s219, 4
      %s224 = sadd.s32 %s222, %s223
      %s225 = smul.addr %s224, 4
      %s226 = scalar_lea.vmem %s1, %s225
      %p227 = pneg %p78
      %p228 = pneg %p75
      %p229 = pneg %p99
      %p230 = pneg %p96
      %p231 = pneg %p120
      %p232 = pneg %p117
      %p233 = pneg %p148
      %p234 = pneg %p145
      %s235 = smul.u32 8, %s20
      %p236 = scmp.lt.s32.totalorder %s19, 1
      %s237 = scalar_select %p236, %s19, 1
      %p238 = scmp.lt.s32.totalorder %s235, 7
      %s239 = scalar_select %p238, %s235, 7
      %s240 = smul.addr %s237, 8
      %s241 = sadd.s32 %s239, %s240
      %s242 = smul.addr %s241, 8
      %s243 = scalar_lea.vmem %s4, %s242
      %s244 = smul.u32 16, %s20
      %p245 = scmp.lt.s32.totalorder %s19, 1
      %s246 = scalar_select %p245, %s19, 1
      %p247 = scmp.lt.s32.totalorder %s244, 15
      %s248 = scalar_select %p247, %s244, 15
      %s249 = smul.addr %s248, 4
      %s250 = smul.addr %s246, 64
      %s251 = sadd.s32 %s249, %s250
      %s252 = smul.addr %s251, 4
      %s253 = scalar_lea.vmem %s0, %s252
      %s254 = smul.u32 16, %s20
      %p255 = scmp.lt.s32.totalorder %s19, 1
      %s256 = scalar_select %p255, %s19, 1
      %p257 = scmp.lt.s32.totalorder %s20, 0
      %s258 = scalar_select %p257, %s20, 0
      %s259 = smul.addr %s258, 4
      %s260 = smul.addr %s256, 4
      %s261 = sadd.s32 %s259, %s260
      %s262 = smul.addr %s261, 4
      %s263 = scalar_lea.vmem %s1, %s262
      %s264 = smul.u32 8, %s20
      %p265 = scmp.lt.s32.totalorder %s19, 1
      %s266 = scalar_select %p265, %s19, 1
      %p267 = scmp.lt.s32.totalorder %s264, 7
      %s268 = scalar_select %p267, %s264, 7
      %s269 = smul.addr %s266, 8
      %s270 = sadd.s32 %s268, %s269
      %s271 = smul.addr %s270, 8
      %s272 = scalar_lea.vmem %s4, %s271
      %s273 = smul.u32 8, %s20
      %v274 = vld [vmem:[%s2] sm:$0xf]
      %v275 = vld [vmem:[%s2 + $0x4] sm:$0xf]
      %v276 = vld [vmem:[%s2 + $0x8] sm:$0xf]
      %v277 = vld [vmem:[%s2 + $0xc] sm:$0xf]
      %v278 = vld [vmem:[%s2 + $0x10] sm:$0xf]
      %v279 = vld [vmem:[%s2 + $0x14] sm:$0xf]
      %v280 = vld [vmem:[%s2 + $0x18] sm:$0xf]
      %v281 = vld [vmem:[%s2 + $0x1c] sm:$0xf]
      %v282 = vld [vmem:[%s2 + $0x20] sm:$0xf]
      %v283 = vld [vmem:[%s2 + $0x24] sm:$0xf]
      %v284 = vld [vmem:[%s2 + $0x28] sm:$0xf]
      %v285 = vld [vmem:[%s2 + $0x2c] sm:$0xf]
      %v286 = vld [vmem:[%s2 + $0x30] sm:$0xf]
      %v287 = vld [vmem:[%s2 + $0x34] sm:$0xf]
      %v288 = vld [vmem:[%s2 + $0x38] sm:$0xf]
      %v289 = vld [vmem:[%s2 + $0x3c] sm:$0xf]
      %v290 = vld [vmem:[%s2 + $0x40] sm:$0xf]
      %v291 = vld [vmem:[%s2 + $0x44] sm:$0xf]
      %v292 = vld [vmem:[%s2 + $0x48] sm:$0xf]
      %v293 = vld [vmem:[%s2 + $0x4c] sm:$0xf]
      %v294 = vld [vmem:[%s2 + $0x50] sm:$0xf]
      %v295 = vld [vmem:[%s2 + $0x54] sm:$0xf]
      %v296 = vld [vmem:[%s2 + $0x58] sm:$0xf]
      %v297 = vld [vmem:[%s2 + $0x5c] sm:$0xf]
      %v298 = vld [vmem:[%s2 + $0x60] sm:$0xf]
      %v299 = vld [vmem:[%s2 + $0x64] sm:$0xf]
      %v300 = vld [vmem:[%s2 + $0x68] sm:$0xf]
      %v301 = vld [vmem:[%s2 + $0x6c] sm:$0xf]
      %v302 = vld [vmem:[%s2 + $0x70] sm:$0xf]
      %v303 = vld [vmem:[%s2 + $0x74] sm:$0xf]
      %v304 = vld [vmem:[%s2 + $0x78] sm:$0xf]
      %v305 = vld [vmem:[%s2 + $0x7c] sm:$0xf]
      %v306 = vld [vmem:[%s3] sm:$0x1]
      %v307 = vld [vmem:[%s253] sm:$0xff]
      %v308 = vld [vmem:[%s253 + $0x8] sm:$0xff]
      %v309 = vld [vmem:[%s253 + $0x10] sm:$0xff]
      %v310 = vld [vmem:[%s253 + $0x18] sm:$0xff]
      %v311 = vld [vmem:[%s253 + $0x20] sm:$0xff]
      %v312 = vld [vmem:[%s253 + $0x28] sm:$0xff]
      %v313 = vld [vmem:[%s253 + $0x30] sm:$0xff]
      %v314 = vld [vmem:[%s253 + $0x38] sm:$0xff]
      %v315 = vld [vmem:[%s253 + $0x40] sm:$0xff]
      %v316 = vld [vmem:[%s253 + $0x48] sm:$0xff]
      %v317 = vld [vmem:[%s253 + $0x50] sm:$0xff]
      %v318 = vld [vmem:[%s253 + $0x58] sm:$0xff]
      %v319 = vld [vmem:[%s253 + $0x60] sm:$0xff]
      %v320 = vld [vmem:[%s253 + $0x68] sm:$0xff]
      %v321 = vld [vmem:[%s253 + $0x70] sm:$0xff]
      %v322 = vld [vmem:[%s253 + $0x78] sm:$0xff]
      %v323 = vld [vmem:[%s253 + $0x80] sm:$0xff]
      %v324 = vld [vmem:[%s253 + $0x88] sm:$0xff]
      %v325 = vld [vmem:[%s253 + $0x90] sm:$0xff]
      %v326 = vld [vmem:[%s253 + $0x98] sm:$0xff]
      %v327 = vld [vmem:[%s253 + $0xa0] sm:$0xff]
      %v328 = vld [vmem:[%s253 + $0xa8] sm:$0xff]
      %v329 = vld [vmem:[%s253 + $0xb0] sm:$0xff]
      %v330 = vld [vmem:[%s253 + $0xb8] sm:$0xff]
      %v331 = vld [vmem:[%s253 + $0xc0] sm:$0xff]
      %v332 = vld [vmem:[%s253 + $0xc8] sm:$0xff]
      %v333 = vld [vmem:[%s253 + $0xd0] sm:$0xff]
      %v334 = vld [vmem:[%s253 + $0xd8] sm:$0xff]
      %v335 = vld [vmem:[%s253 + $0xe0] sm:$0xff]
      %v336 = vld [vmem:[%s253 + $0xe8] sm:$0xff]
      %v337 = vld [vmem:[%s253 + $0xf0] sm:$0xff]
      %v338 = vld [vmem:[%s253 + $0xf8] sm:$0xff]
      %v340 = vperm.slane %v306, 0
      %v374 = vunpack.c.l.b16 %v307
      %v375 = vunpack.c.h.b16 %v307
      %v376 = vunpack.c.l.b16 %v308
      %v377 = vunpack.c.h.b16 %v308
      %v378 = vunpack.c.l.b16 %v309
      %v379 = vunpack.c.h.b16 %v309
      %v380 = vunpack.c.l.b16 %v310
      %v381 = vunpack.c.h.b16 %v310
      %v382 = vunpack.c.l.b16 %v311
      %v383 = vunpack.c.h.b16 %v311
      %v384 = vunpack.c.l.b16 %v312
      %v385 = vunpack.c.h.b16 %v312
      %v386 = vunpack.c.l.b16 %v313
      %v387 = vunpack.c.h.b16 %v313
      %v388 = vunpack.c.l.b16 %v314
      %v389 = vunpack.c.h.b16 %v314
      %v390 = vunpack.c.l.b16 %v315
      %v391 = vunpack.c.h.b16 %v315
      %v392 = vunpack.c.l.b16 %v316
      %v393 = vunpack.c.h.b16 %v316
      %v394 = vunpack.c.l.b16 %v317
      %v395 = vunpack.c.h.b16 %v317
      %v396 = vunpack.c.l.b16 %v318
      %v397 = vunpack.c.h.b16 %v318
      %v398 = vunpack.c.l.b16 %v319
      %v399 = vunpack.c.h.b16 %v319
      %v400 = vunpack.c.l.b16 %v320
      %v401 = vunpack.c.h.b16 %v320
      %v402 = vunpack.c.l.b16 %v321
      %v403 = vunpack.c.h.b16 %v321
      %v404 = vunpack.c.l.b16 %v322
      %v405 = vunpack.c.h.b16 %v322
      %v406 = vunpack.c.l.b16 %v323
      %v407 = vunpack.c.h.b16 %v323
      %v408 = vunpack.c.l.b16 %v324
      %v409 = vunpack.c.h.b16 %v324
      %v410 = vunpack.c.l.b16 %v325
      %v411 = vunpack.c.h.b16 %v325
      %v412 = vunpack.c.l.b16 %v326
      %v413 = vunpack.c.h.b16 %v326
      %v414 = vunpack.c.l.b16 %v327
      %v415 = vunpack.c.h.b16 %v327
      %v416 = vunpack.c.l.b16 %v328
      %v417 = vunpack.c.h.b16 %v328
      %v418 = vunpack.c.l.b16 %v329
      %v419 = vunpack.c.h.b16 %v329
      %v420 = vunpack.c.l.b16 %v330
      %v421 = vunpack.c.h.b16 %v330
      %v422 = vunpack.c.l.b16 %v331
      %v423 = vunpack.c.h.b16 %v331
      %v424 = vunpack.c.l.b16 %v332
      %v425 = vunpack.c.h.b16 %v332
      %v426 = vunpack.c.l.b16 %v333
      %v427 = vunpack.c.h.b16 %v333
      %v428 = vunpack.c.l.b16 %v334
      %v429 = vunpack.c.h.b16 %v334
      %v430 = vunpack.c.l.b16 %v335
      %v431 = vunpack.c.h.b16 %v335
      %v432 = vunpack.c.l.b16 %v336
      %v433 = vunpack.c.h.b16 %v336
      %v434 = vunpack.c.l.b16 %v337
      %v435 = vunpack.c.h.b16 %v337
      %v436 = vunpack.c.l.b16 %v338
      %v437 = vunpack.c.h.b16 %v338
      %v438 = vpack.c.b16 %v376, %v374
      %v439 = vpack.c.b16 %v377, %v375
      %v440 = vpack.c.b16 %v380, %v378
      %v441 = vpack.c.b16 %v381, %v379
      %v442 = vpack.c.b16 %v384, %v382
      %v443 = vpack.c.b16 %v385, %v383
      %v444 = vpack.c.b16 %v388, %v386
      %v445 = vpack.c.b16 %v389, %v387
      %v446 = vpack.c.b16 %v392, %v390
      %v447 = vpack.c.b16 %v393, %v391
      %v448 = vpack.c.b16 %v396, %v394
      %v449 = vpack.c.b16 %v397, %v395
      %v450 = vpack.c.b16 %v400, %v398
      %v451 = vpack.c.b16 %v401, %v399
      %v452 = vpack.c.b16 %v404, %v402
      %v453 = vpack.c.b16 %v405, %v403
      %v454 = vpack.c.b16 %v408, %v406
      %v455 = vpack.c.b16 %v409, %v407
      %v456 = vpack.c.b16 %v412, %v410
      %v457 = vpack.c.b16 %v413, %v411
      %v458 = vpack.c.b16 %v416, %v414
      %v459 = vpack.c.b16 %v417, %v415
      %v460 = vpack.c.b16 %v420, %v418
      %v461 = vpack.c.b16 %v421, %v419
      %v462 = vpack.c.b16 %v424, %v422
      %v463 = vpack.c.b16 %v425, %v423
      %v464 = vpack.c.b16 %v428, %v426
      %v465 = vpack.c.b16 %v429, %v427
      %v466 = vpack.c.b16 %v432, %v430
      %v467 = vpack.c.b16 %v433, %v431
      %v468 = vpack.c.b16 %v436, %v434
      %v469 = vpack.c.b16 %v437, %v435
      %v534 = vunpack.c.l.b16 %v274
      %v535 = vunpack.c.l.b16 %v275
      %v536 = vunpack.c.l.b16 %v276
      %v537 = vunpack.c.l.b16 %v277
      %v538 = vunpack.c.l.b16 %v278
      %v539 = vunpack.c.l.b16 %v279
      %v540 = vunpack.c.l.b16 %v280
      %v541 = vunpack.c.l.b16 %v281
      %v542 = vunpack.c.l.b16 %v282
      %v543 = vunpack.c.l.b16 %v283
      %v544 = vunpack.c.l.b16 %v284
      %v545 = vunpack.c.l.b16 %v285
      %v546 = vunpack.c.l.b16 %v286
      %v547 = vunpack.c.l.b16 %v287
      %v548 = vunpack.c.l.b16 %v288
      %v549 = vunpack.c.l.b16 %v289
      %v550 = vunpack.c.l.b16 %v290
      %v551 = vunpack.c.l.b16 %v291
      %v552 = vunpack.c.l.b16 %v292
      %v553 = vunpack.c.l.b16 %v293
      %v554 = vunpack.c.l.b16 %v294
      %v555 = vunpack.c.l.b16 %v295
      %v556 = vunpack.c.l.b16 %v296
      %v557 = vunpack.c.l.b16 %v297
      %v558 = vunpack.c.l.b16 %v298
      %v559 = vunpack.c.l.b16 %v299
      %v560 = vunpack.c.l.b16 %v300
      %v561 = vunpack.c.l.b16 %v301
      %v562 = vunpack.c.l.b16 %v302
      %v563 = vunpack.c.l.b16 %v303
      %v564 = vunpack.c.l.b16 %v304
      %v565 = vunpack.c.l.b16 %v305
      %v566 = vpack.c.b16 %v535, %v534
      %v567 = vpack.c.b16 %v537, %v536
      %v568 = vpack.c.b16 %v539, %v538
      %v569 = vpack.c.b16 %v541, %v540
      %v570 = vpack.c.b16 %v543, %v542
      %v571 = vpack.c.b16 %v545, %v544
      %v572 = vpack.c.b16 %v547, %v546
      %v573 = vpack.c.b16 %v549, %v548
      %v574 = vpack.c.b16 %v551, %v550
      %v575 = vpack.c.b16 %v553, %v552
      %v576 = vpack.c.b16 %v555, %v554
      %v577 = vpack.c.b16 %v557, %v556
      %v578 = vpack.c.b16 %v559, %v558
      %v579 = vpack.c.b16 %v561, %v560
      %v580 = vpack.c.b16 %v563, %v562
      %v581 = vpack.c.b16 %v565, %v564
      %598 = vmatpush.bf16.msra.mxu0 %v573
      %599 = vmatpush.bf16.msra.mxu0 %v572
      %600 = vmatpush.bf16.msra.mxu0 %v571
      %601 = vmatpush.bf16.msra.mxu0 %v570
      %602 = vmatpush.bf16.msra.mxu0 %v569
      %603 = vmatpush.bf16.msra.mxu0 %v568
      %604 = vmatpush.bf16.msra.mxu0 %v567
      %605 = vmatpush.bf16.msra.mxu0 %v566
      %606 = vmatmul.bf16.gmra.mxu0 %v438
      %v607 = vpop.f32.mrf.mxu0
      %v608 = vadd.f32 %v340, %v607
      %v609 = vpop.f32.mrf.mxu0
      %v610 = vadd.f32 %v340, %v609
      %611 = vmatmul.bf16.gmra.mxu0 %v440
      %v612 = vpop.f32.mrf.mxu0
      %v613 = vadd.f32 %v340, %v612
      %v614 = vpop.f32.mrf.mxu0
      %v615 = vadd.f32 %v340, %v614
      %616 = vmatmul.bf16.gmra.mxu0 %v442
      %v617 = vpop.f32.mrf.mxu0
      %v618 = vadd.f32 %v340, %v617
      %v619 = vpop.f32.mrf.mxu0
      %v620 = vadd.f32 %v340, %v619
      %621 = vmatmul.bf16.gmra.mxu0 %v444
      %v622 = vpop.f32.mrf.mxu0
      %v623 = vadd.f32 %v340, %v622
      %v624 = vpop.f32.mrf.mxu0
      %v625 = vadd.f32 %v340, %v624
      %626 = vmatmul.bf16.gmra.mxu0 %v446
      %v627 = vpop.f32.mrf.mxu0
      %v628 = vadd.f32 %v340, %v627
      %v629 = vpop.f32.mrf.mxu0
      %v630 = vadd.f32 %v340, %v629
      %631 = vmatmul.bf16.gmra.mxu0 %v448
      %v632 = vpop.f32.mrf.mxu0
      %v633 = vadd.f32 %v340, %v632
      %v634 = vpop.f32.mrf.mxu0
      %v635 = vadd.f32 %v340, %v634
      %636 = vmatmul.bf16.gmra.mxu0 %v450
      %v637 = vpop.f32.mrf.mxu0
      %v638 = vadd.f32 %v340, %v637
      %v639 = vpop.f32.mrf.mxu0
      %v640 = vadd.f32 %v340, %v639
      %641 = vmatmul.bf16.gmra.mxu0 %v452
      %v642 = vpop.f32.mrf.mxu0
      %v643 = vadd.f32 %v340, %v642
      %v644 = vpop.f32.mrf.mxu0
      %v645 = vadd.f32 %v340, %v644
      %646 = vmatmul.bf16.gmra.mxu0 %v454
      %v647 = vpop.f32.mrf.mxu0
      %v648 = vadd.f32 %v340, %v647
      %v649 = vpop.f32.mrf.mxu0
      %v650 = vadd.f32 %v340, %v649
      %651 = vmatmul.bf16.gmra.mxu0 %v456
      %v652 = vpop.f32.mrf.mxu0
      %v653 = vadd.f32 %v340, %v652
      %v654 = vpop.f32.mrf.mxu0
      %v655 = vadd.f32 %v340, %v654
      %656 = vmatmul.bf16.gmra.mxu0 %v458
      %v657 = vpop.f32.mrf.mxu0
      %v658 = vadd.f32 %v340, %v657
      %v659 = vpop.f32.mrf.mxu0
      %v660 = vadd.f32 %v340, %v659
      %661 = vmatmul.bf16.gmra.mxu0 %v460
      %v662 = vpop.f32.mrf.mxu0
      %v663 = vadd.f32 %v340, %v662
      %v664 = vpop.f32.mrf.mxu0
      %v665 = vadd.f32 %v340, %v664
      %666 = vmatmul.bf16.gmra.mxu0 %v462
      %v667 = vpop.f32.mrf.mxu0
      %v668 = vadd.f32 %v340, %v667
      %v669 = vpop.f32.mrf.mxu0
      %v670 = vadd.f32 %v340, %v669
      %671 = vmatmul.bf16.gmra.mxu0 %v464
      %v672 = vpop.f32.mrf.mxu0
      %v673 = vadd.f32 %v340, %v672
      %v674 = vpop.f32.mrf.mxu0
      %v675 = vadd.f32 %v340, %v674
      %676 = vmatmul.bf16.gmra.mxu0 %v466
      %v677 = vpop.f32.mrf.mxu0
      %v678 = vadd.f32 %v340, %v677
      %v679 = vpop.f32.mrf.mxu0
      %v680 = vadd.f32 %v340, %v679
      %681 = vmatmul.bf16.gmra.mxu0 %v468
      %v682 = vpop.f32.mrf.mxu0
      %v683 = vadd.f32 %v340, %v682
      %v684 = vpop.f32.mrf.mxu0
      %v685 = vadd.f32 %v340, %v684
      %686 = vdwg.mxu0
      %687 = vmatpush.bf16.msra.mxu0 %v581
      %688 = vmatpush.bf16.msra.mxu0 %v580
      %689 = vmatpush.bf16.msra.mxu0 %v579
      %690 = vmatpush.bf16.msra.mxu0 %v578
      %691 = vmatpush.bf16.msra.mxu0 %v577
      %692 = vmatpush.bf16.msra.mxu0 %v576
      %693 = vmatpush.bf16.msra.mxu0 %v575
      %694 = vmatpush.bf16.msra.mxu0 %v574
      %695 = vmatmul.bf16.gmra.mxu0 %v439
      %v696 = vpop.f32.mrf.mxu0
      %v697 = vadd.f32 %v608, %v696
      %v698 = vpop.f32.mrf.mxu0
      %v699 = vadd.f32 %v610, %v698
      %700 = vmatmul.bf16.gmra.mxu0 %v441
      %v701 = vpop.f32.mrf.mxu0
      %v702 = vadd.f32 %v613, %v701
      %v703 = vpop.f32.mrf.mxu0
      %v704 = vadd.f32 %v615, %v703
      %705 = vmatmul.bf16.gmra.mxu0 %v443
      %v706 = vpop.f32.mrf.mxu0
      %v707 = vadd.f32 %v618, %v706
      %v708 = vpop.f32.mrf.mxu0
      %v709 = vadd.f32 %v620, %v708
      %710 = vmatmul.bf16.gmra.mxu0 %v445
      %v711 = vpop.f32.mrf.mxu0
      %v712 = vadd.f32 %v623, %v711
      %v713 = vpop.f32.mrf.mxu0
      %v714 = vadd.f32 %v625, %v713
      %715 = vmatmul.bf16.gmra.mxu0 %v447
      %v716 = vpop.f32.mrf.mxu0
      %v717 = vadd.f32 %v628, %v716
      %v718 = vpop.f32.mrf.mxu0
      %v719 = vadd.f32 %v630, %v718
      %720 = vmatmul.bf16.gmra.mxu0 %v449
      %v721 = vpop.f32.mrf.mxu0
      %v722 = vadd.f32 %v633, %v721
      %v723 = vpop.f32.mrf.mxu0
      %v724 = vadd.f32 %v635, %v723
      %725 = vmatmul.bf16.gmra.mxu0 %v451
      %v726 = vpop.f32.mrf.mxu0
      %v727 = vadd.f32 %v638, %v726
      %v728 = vpop.f32.mrf.mxu0
      %v729 = vadd.f32 %v640, %v728
      %730 = vmatmul.bf16.gmra.mxu0 %v453
      %v731 = vpop.f32.mrf.mxu0
      %v732 = vadd.f32 %v643, %v731
      %v733 = vpop.f32.mrf.mxu0
      %v734 = vadd.f32 %v645, %v733
      %735 = vmatmul.bf16.gmra.mxu0 %v455
      %v736 = vpop.f32.mrf.mxu0
      %v737 = vadd.f32 %v648, %v736
      %v738 = vpop.f32.mrf.mxu0
      %v739 = vadd.f32 %v650, %v738
      %740 = vmatmul.bf16.gmra.mxu0 %v457
      %v741 = vpop.f32.mrf.mxu0
      %v742 = vadd.f32 %v653, %v741
      %v743 = vpop.f32.mrf.mxu0
      %v744 = vadd.f32 %v655, %v743
      %745 = vmatmul.bf16.gmra.mxu0 %v459
      %v746 = vpop.f32.mrf.mxu0
      %v747 = vadd.f32 %v658, %v746
      %v748 = vpop.f32.mrf.mxu0
      %v749 = vadd.f32 %v660, %v748
      %750 = vmatmul.bf16.gmra.mxu0 %v461
      %v751 = vpop.f32.mrf.mxu0
      %v752 = vadd.f32 %v663, %v751
      %v753 = vpop.f32.mrf.mxu0
      %v754 = vadd.f32 %v665, %v753
      %755 = vmatmul.bf16.gmra.mxu0 %v463
      %v756 = vpop.f32.mrf.mxu0
      %v757 = vadd.f32 %v668, %v756
      %v758 = vpop.f32.mrf.mxu0
      %v759 = vadd.f32 %v670, %v758
      %760 = vmatmul.bf16.gmra.mxu0 %v465
      %v761 = vpop.f32.mrf.mxu0
      %v762 = vadd.f32 %v673, %v761
      %v763 = vpop.f32.mrf.mxu0
      %v764 = vadd.f32 %v675, %v763
      %765 = vmatmul.bf16.gmra.mxu0 %v467
      %v766 = vpop.f32.mrf.mxu0
      %v767 = vadd.f32 %v678, %v766
      %v768 = vpop.f32.mrf.mxu0
      %v769 = vadd.f32 %v680, %v768
      %770 = vmatmul.bf16.gmra.mxu0 %v469
      %v771 = vpop.f32.mrf.mxu0
      %v772 = vadd.f32 %v683, %v771
      %v773 = vpop.f32.mrf.mxu0
      %v774 = vadd.f32 %v685, %v773
      %775 = vdwg.mxu0
      %v776 = vmax.f32 %v697, 0.0
      %v777 = vmax.f32 %v699, 0.0
      %v778 = vmax.f32 %v702, 0.0
      %v779 = vmax.f32 %v704, 0.0
      %v780 = vmax.f32 %v707, 0.0
      %v781 = vmax.f32 %v709, 0.0
      %v782 = vmax.f32 %v712, 0.0
      %v783 = vmax.f32 %v714, 0.0
      %v784 = vmax.f32 %v717, 0.0
      %v785 = vmax.f32 %v719, 0.0
      %v786 = vmax.f32 %v722, 0.0
      %v787 = vmax.f32 %v724, 0.0
      %v788 = vmax.f32 %v727, 0.0
      %v789 = vmax.f32 %v729, 0.0
      %v790 = vmax.f32 %v732, 0.0
      %v791 = vmax.f32 %v734, 0.0
      %v792 = vmax.f32 %v737, 0.0
      %v793 = vmax.f32 %v739, 0.0
      %v794 = vmax.f32 %v742, 0.0
      %v795 = vmax.f32 %v744, 0.0
      %v796 = vmax.f32 %v747, 0.0
      %v797 = vmax.f32 %v749, 0.0
      %v798 = vmax.f32 %v752, 0.0
      %v799 = vmax.f32 %v754, 0.0
      %v800 = vmax.f32 %v757, 0.0
      %v801 = vmax.f32 %v759, 0.0
      %v802 = vmax.f32 %v762, 0.0
      %v803 = vmax.f32 %v764, 0.0
      %v804 = vmax.f32 %v767, 0.0
      %v805 = vmax.f32 %v769, 0.0
      %v806 = vmax.f32 %v772, 0.0
      %v807 = vmax.f32 %v774, 0.0
      %s808 = scalar_lea.vmem [#allocation2], 16
      %809 = vst [vmem:[%s808] sm:$0xff] %v776
      %810 = vst [vmem:[%s808 + $0x8] sm:$0xff] %v777
      %811 = vst [vmem:[%s808 + $0x10] sm:$0xff] %v778
      %812 = vst [vmem:[%s808 + $0x18] sm:$0xff] %v779
      %813 = vst [vmem:[%s808 + $0x20] sm:$0xff] %v780
      %814 = vst [vmem:[%s808 + $0x28] sm:$0xff] %v781
      %815 = vst [vmem:[%s808 + $0x30] sm:$0xff] %v782
      %816 = vst [vmem:[%s808 + $0x38] sm:$0xff] %v783
      %817 = vst [vmem:[%s808 + $0x40] sm:$0xff] %v784
      %818 = vst [vmem:[%s808 + $0x48] sm:$0xff] %v785
      %819 = vst [vmem:[%s808 + $0x50] sm:$0xff] %v786
      %820 = vst [vmem:[%s808 + $0x58] sm:$0xff] %v787
      %821 = vst [vmem:[%s808 + $0x60] sm:$0xff] %v788
      %822 = vst [vmem:[%s808 + $0x68] sm:$0xff] %v789
      %823 = vst [vmem:[%s808 + $0x70] sm:$0xff] %v790
      %824 = vst [vmem:[%s808 + $0x78] sm:$0xff] %v791
      %825 = vst [vmem:[%s808 + $0x80] sm:$0xff] %v792
      %826 = vst [vmem:[%s808 + $0x88] sm:$0xff] %v793
      %827 = vst [vmem:[%s808 + $0x90] sm:$0xff] %v794
      %828 = vst [vmem:[%s808 + $0x98] sm:$0xff] %v795
      %829 = vst [vmem:[%s808 + $0xa0] sm:$0xff] %v796
      %830 = vst [vmem:[%s808 + $0xa8] sm:$0xff] %v797
      %831 = vst [vmem:[%s808 + $0xb0] sm:$0xff] %v798
      %832 = vst [vmem:[%s808 + $0xb8] sm:$0xff] %v799
      %833 = vst [vmem:[%s808 + $0xc0] sm:$0xff] %v800
      %834 = vst [vmem:[%s808 + $0xc8] sm:$0xff] %v801
      %835 = vst [vmem:[%s808 + $0xd0] sm:$0xff] %v802
      %836 = vst [vmem:[%s808 + $0xd8] sm:$0xff] %v803
      %837 = vst [vmem:[%s808 + $0xe0] sm:$0xff] %v804
      %838 = vst [vmem:[%s808 + $0xe8] sm:$0xff] %v805
      %839 = vst [vmem:[%s808 + $0xf0] sm:$0xff] %v806
      %840 = vst [vmem:[%s808 + $0xf8] sm:$0xff] %v807
      %v841 = vld [vmem:[%s263] sm:$0xff]
      %v842 = vld [vmem:[%s263 + $0x8] sm:$0xff]
      %v845 = vunpack.c.l.b16 %v841
      %v846 = vunpack.c.h.b16 %v841
      %v847 = vunpack.c.l.b16 %v842
      %v848 = vunpack.c.h.b16 %v842
      %v849 = vpack.c.b16 %v847, %v845
      %v850 = vpack.c.b16 %v848, %v846
      %853 = vmatpush.bf16.msra.mxu0 %v573
      %854 = vmatpush.bf16.msra.mxu0 %v572
      %855 = vmatpush.bf16.msra.mxu0 %v571
      %856 = vmatpush.bf16.msra.mxu0 %v570
      %857 = vmatpush.bf16.msra.mxu0 %v569
      %858 = vmatpush.bf16.msra.mxu0 %v568
      %859 = vmatpush.bf16.msra.mxu0 %v567
      %860 = vmatpush.bf16.msra.mxu0 %v566
      %861 = vmatmul.bf16.gmra.mxu0 %v849
      %v862 = vpop.f32.mrf.mxu0
      %v863 = vadd.f32 %v340, %v862
      %v864 = vpop.f32.mrf.mxu0
      %v865 = vadd.f32 %v340, %v864
      %866 = vdwg.mxu0
      %867 = vmatpush.bf16.msra.mxu0 %v581
      %868 = vmatpush.bf16.msra.mxu0 %v580
      %869 = vmatpush.bf16.msra.mxu0 %v579
      %870 = vmatpush.bf16.msra.mxu0 %v578
      %871 = vmatpush.bf16.msra.mxu0 %v577
      %872 = vmatpush.bf16.msra.mxu0 %v576
      %873 = vmatpush.bf16.msra.mxu0 %v575
      %874 = vmatpush.bf16.msra.mxu0 %v574
      %875 = vmatmul.bf16.gmra.mxu0 %v850
      %v876 = vpop.f32.mrf.mxu0
      %v877 = vadd.f32 %v863, %v876
      %v878 = vpop.f32.mrf.mxu0
      %v879 = vadd.f32 %v865, %v878
      %880 = vdwg.mxu0
      %v881 = vmax.f32 %v877, 0.0
      %v882 = vmax.f32 %v879, 0.0
      %p883 = scmp.gt.s32.totalorder %s20, 0
      %s884 = scalar_select %p883, 1, 0
      %s885 = scvt.s32.f32 %s884
      %v886 = vstv %s885
      %v887 = vmul.f32 %v881, %v886
      %v888 = vmul.f32 %v882, %v886
      %889 = vst [vmem:[#allocation2] sm:$0xff] %v887
      %890 = vst [vmem:[#allocation2 + $0x8] sm:$0xff] %v888
      %v891 = vld [vmem:[#allocation2] sm:$0xff]
      %v892 = vld [vmem:[#allocation2 + $0x8] sm:$0xff]
      %v893 = vld [vmem:[#allocation2 + $0x20] sm:$0xff]
      %v894 = vld [vmem:[#allocation2 + $0x28] sm:$0xff]
      %v895 = vld [vmem:[#allocation2 + $0x40] sm:$0xff]
      %v896 = vld [vmem:[#allocation2 + $0x48] sm:$0xff]
      %v897 = vld [vmem:[#allocation2 + $0x60] sm:$0xff]
      %v898 = vld [vmem:[#allocation2 + $0x68] sm:$0xff]
      %v899 = vld [vmem:[#allocation2 + $0x80] sm:$0xff]
      %v900 = vld [vmem:[#allocation2 + $0x88] sm:$0xff]
      %v901 = vld [vmem:[#allocation2 + $0xa0] sm:$0xff]
      %v902 = vld [vmem:[#allocation2 + $0xa8] sm:$0xff]
      %v903 = vld [vmem:[#allocation2 + $0xc0] sm:$0xff]
      %v904 = vld [vmem:[#allocation2 + $0xc8] sm:$0xff]
      %v905 = vld [vmem:[#allocation2 + $0xe0] sm:$0xff]
      %v906 = vld [vmem:[#allocation2 + $0xe8] sm:$0xff]
      %v907 = vld [vmem:[%s808] sm:$0xff]
      %v908 = vld [vmem:[%s808 + $0x8] sm:$0xff]
      %v909 = vld [vmem:[%s808 + $0x20] sm:$0xff]
      %v910 = vld [vmem:[%s808 + $0x28] sm:$0xff]
      %v911 = vld [vmem:[%s808 + $0x40] sm:$0xff]
      %v912 = vld [vmem:[%s808 + $0x48] sm:$0xff]
      %v913 = vld [vmem:[%s808 + $0x60] sm:$0xff]
      %v914 = vld [vmem:[%s808 + $0x68] sm:$0xff]
      %v915 = vld [vmem:[%s808 + $0x80] sm:$0xff]
      %v916 = vld [vmem:[%s808 + $0x88] sm:$0xff]
      %v917 = vld [vmem:[%s808 + $0xa0] sm:$0xff]
      %v918 = vld [vmem:[%s808 + $0xa8] sm:$0xff]
      %v919 = vld [vmem:[%s808 + $0xc0] sm:$0xff]
      %v920 = vld [vmem:[%s808 + $0xc8] sm:$0xff]
      %v921 = vld [vmem:[%s808 + $0xe0] sm:$0xff]
      %v922 = vld [vmem:[%s808 + $0xe8] sm:$0xff]
      %v923 = vmax.f32 %v891, %v907
      %v924 = vmax.f32 %v892, %v908
      %v925 = vmax.f32 %v893, %v909
      %v926 = vmax.f32 %v894, %v910
      %v927 = vmax.f32 %v895, %v911
      %v928 = vmax.f32 %v896, %v912
      %v929 = vmax.f32 %v897, %v913
      %v930 = vmax.f32 %v898, %v914
      %v931 = vmax.f32 %v899, %v915
      %v932 = vmax.f32 %v900, %v916
      %v933 = vmax.f32 %v901, %v917
      %v934 = vmax.f32 %v902, %v918
      %v935 = vmax.f32 %v903, %v919
      %v936 = vmax.f32 %v904, %v920
      %v937 = vmax.f32 %v905, %v921
      %v938 = vmax.f32 %v906, %v922
      %s939 = scalar_lea.vmem [#allocation2], 32
      %v940 = vld [vmem:[%s939] sm:$0xff]
      %v941 = vld [vmem:[%s939 + $0x8] sm:$0xff]
      %v942 = vld [vmem:[%s939 + $0x20] sm:$0xff]
      %v943 = vld [vmem:[%s939 + $0x28] sm:$0xff]
      %v944 = vld [vmem:[%s939 + $0x40] sm:$0xff]
      %v945 = vld [vmem:[%s939 + $0x48] sm:$0xff]
      %v946 = vld [vmem:[%s939 + $0x60] sm:$0xff]
      %v947 = vld [vmem:[%s939 + $0x68] sm:$0xff]
      %v948 = vld [vmem:[%s939 + $0x80] sm:$0xff]
      %v949 = vld [vmem:[%s939 + $0x88] sm:$0xff]
      %v950 = vld [vmem:[%s939 + $0xa0] sm:$0xff]
      %v951 = vld [vmem:[%s939 + $0xa8] sm:$0xff]
      %v952 = vld [vmem:[%s939 + $0xc0] sm:$0xff]
      %v953 = vld [vmem:[%s939 + $0xc8] sm:$0xff]
      %v954 = vld [vmem:[%s939 + $0xe0] sm:$0xff]
      %v955 = vld [vmem:[%s939 + $0xe8] sm:$0xff]
      %v956 = vmax.f32 %v923, %v940
      %v957 = vmax.f32 %v924, %v941
      %v958 = vmax.f32 %v925, %v942
      %v959 = vmax.f32 %v926, %v943
      %v960 = vmax.f32 %v927, %v944
      %v961 = vmax.f32 %v928, %v945
      %v962 = vmax.f32 %v929, %v946
      %v963 = vmax.f32 %v930, %v947
      %v964 = vmax.f32 %v931, %v948
      %v965 = vmax.f32 %v932, %v949
      %v966 = vmax.f32 %v933, %v950
      %v967 = vmax.f32 %v934, %v951
      %v968 = vmax.f32 %v935, %v952
      %v969 = vmax.f32 %v936, %v953
      %v970 = vmax.f32 %v937, %v954
      %v971 = vmax.f32 %v938, %v955
      %972 = vst [vmem:[#allocation3] sm:$0xff] %v956
      %973 = vst [vmem:[#allocation3 + $0x8] sm:$0xff] %v957
      %974 = vst [vmem:[#allocation3 + $0x10] sm:$0xff] %v958
      %975 = vst [vmem:[#allocation3 + $0x18] sm:$0xff] %v959
      %976 = vst [vmem:[#allocation3 + $0x20] sm:$0xff] %v960
      %977 = vst [vmem:[#allocation3 + $0x28] sm:$0xff] %v961
      %978 = vst [vmem:[#allocation3 + $0x30] sm:$0xff] %v962
      %979 = vst [vmem:[#allocation3 + $0x38] sm:$0xff] %v963
      %980 = vst [vmem:[#allocation3 + $0x40] sm:$0xff] %v964
      %981 = vst [vmem:[#allocation3 + $0x48] sm:$0xff] %v965
      %982 = vst [vmem:[#allocation3 + $0x50] sm:$0xff] %v966
      %983 = vst [vmem:[#allocation3 + $0x58] sm:$0xff] %v967
      %984 = vst [vmem:[#allocation3 + $0x60] sm:$0xff] %v968
      %985 = vst [vmem:[#allocation3 + $0x68] sm:$0xff] %v969
      %986 = vst [vmem:[#allocation3 + $0x70] sm:$0xff] %v970
      %987 = vst [vmem:[#allocation3 + $0x78] sm:$0xff] %v971
      %v988 = vld [vmem:[#allocation3] sm:$0x1]
      %v989 = vld [vmem:[#allocation3 + $0x10] sm:$0x1]
      %v990 = vld [vmem:[#allocation3 + $0x20] sm:$0x1]
      %v991 = vld [vmem:[#allocation3 + $0x30] sm:$0x1]
      %v992 = vld [vmem:[#allocation3 + $0x40] sm:$0x1]
      %v993 = vld [vmem:[#allocation3 + $0x50] sm:$0x1]
      %v994 = vld [vmem:[#allocation3 + $0x60] sm:$0x1]
      %v995 = vld [vmem:[#allocation3 + $0x70] sm:$0x1]
      %v996 = vld [vmem:[#allocation3 + $0x1] sm:$0x1]
      %v997 = vld [vmem:[#allocation3 + $0x11] sm:$0x1]
      %v998 = vld [vmem:[#allocation3 + $0x21] sm:$0x1]
      %v999 = vld [vmem:[#allocation3 + $0x31] sm:$0x1]
      %v1000 = vld [vmem:[#allocation3 + $0x41] sm:$0x1]
      %v1001 = vld [vmem:[#allocation3 + $0x51] sm:$0x1]
      %v1002 = vld [vmem:[#allocation3 + $0x61] sm:$0x1]
      %v1003 = vld [vmem:[#allocation3 + $0x71] sm:$0x1]
      %v1004 = vmax.f32 %v988, %v996
      %v1005 = vmax.f32 %v989, %v997
      %v1006 = vmax.f32 %v990, %v998
      %v1007 = vmax.f32 %v991, %v999
      %v1008 = vmax.f32 %v992, %v1000
      %v1009 = vmax.f32 %v993, %v1001
      %v1010 = vmax.f32 %v994, %v1002
      %v1011 = vmax.f32 %v995, %v1003
      %1012 = vst [vmem:[%s272] sm:$0x1] %v1004
      %1013 = vst [vmem:[%s272 + $0x8] sm:$0x1] %v1005
      %1014 = vst [vmem:[%s272 + $0x10] sm:$0x1] %v1006
      %1015 = vst [vmem:[%s272 + $0x18] sm:$0x1] %v1007
      %1016 = vst [vmem:[%s272 + $0x20] sm:$0x1] %v1008
      %1017 = vst [vmem:[%s272 + $0x28] sm:$0x1] %v1009
      %1018 = vst [vmem:[%s272 + $0x30] sm:$0x1] %v1010
      %1019 = vst [vmem:[%s272 + $0x38] sm:$0x1] %v1011
      %s1020 = scalar_lea.vmem [#allocation3], 1
      %v1021 = vld [vmem:[%s1020] ss:$2 sm:$0x7f]
      %s1022 = scalar_lea.vmem [#allocation3], 17
      %v1023 = vld [vmem:[%s1022] ss:$2 sm:$0x7f]
      %s1024 = scalar_lea.vmem [#allocation3], 33
      %v1025 = vld [vmem:[%s1024] ss:$2 sm:$0x7f]
      %s1026 = scalar_lea.vmem [#allocation3], 49
      %v1027 = vld [vmem:[%s1026] ss:$2 sm:$0x7f]
      %s1028 = scalar_lea.vmem [#allocation3], 65
      %v1029 = vld [vmem:[%s1028] ss:$2 sm:$0x7f]
      %s1030 = scalar_lea.vmem [#allocation3], 81
      %v1031 = vld [vmem:[%s1030] ss:$2 sm:$0x7f]
      %s1032 = scalar_lea.vmem [#allocation3], 97
      %v1033 = vld [vmem:[%s1032] ss:$2 sm:$0x7f]
      %s1034 = scalar_lea.vmem [#allocation3], 113
      %v1035 = vld [vmem:[%s1034] ss:$2 sm:$0x7f]
      %s1036 = scalar_lea.vmem [#allocation3], 2
      %v1037 = vld [vmem:[%s1036] ss:$2 sm:$0x7f]
      %s1038 = scalar_lea.vmem [#allocation3], 18
      %v1039 = vld [vmem:[%s1038] ss:$2 sm:$0x7f]
      %s1040 = scalar_lea.vmem [#allocation3], 34
      %v1041 = vld [vmem:[%s1040] ss:$2 sm:$0x7f]
      %s1042 = scalar_lea.vmem [#allocation3], 50
      %v1043 = vld [vmem:[%s1042] ss:$2 sm:$0x7f]
      %s1044 = scalar_lea.vmem [#allocation3], 66
      %v1045 = vld [vmem:[%s1044] ss:$2 sm:$0x7f]
      %s1046 = scalar_lea.vmem [#allocation3], 82
      %v1047 = vld [vmem:[%s1046] ss:$2 sm:$0x7f]
      %s1048 = scalar_lea.vmem [#allocation3], 98
      %v1049 = vld [vmem:[%s1048] ss:$2 sm:$0x7f]
      %s1050 = scalar_lea.vmem [#allocation3], 114
      %v1051 = vld [vmem:[%s1050] ss:$2 sm:$0x7f]
      %v1052 = vmax.f32 %v1021, %v1037
      %v1053 = vmax.f32 %v1023, %v1039
      %v1054 = vmax.f32 %v1025, %v1041
      %v1055 = vmax.f32 %v1027, %v1043
      %v1056 = vmax.f32 %v1029, %v1045
      %v1057 = vmax.f32 %v1031, %v1047
      %v1058 = vmax.f32 %v1033, %v1049
      %v1059 = vmax.f32 %v1035, %v1051
      %s1060 = scalar_lea.vmem [#allocation3], 3
      %v1061 = vld [vmem:[%s1060] ss:$2 sm:$0x7f]
      %s1062 = scalar_lea.vmem [#allocation3], 19
      %v1063 = vld [vmem:[%s1062] ss:$2 sm:$0x7f]
      %s1064 = scalar_lea.vmem [#allocation3], 35
      %v1065 = vld [vmem:[%s1064] ss:$2 sm:$0x7f]
      %s1066 = scalar_lea.vmem [#allocation3], 51
      %v1067 = vld [vmem:[%s1066] ss:$2 sm:$0x7f]
      %s1068 = scalar_lea.vmem [#allocation3], 67
      %v1069 = vld [vmem:[%s1068] ss:$2 sm:$0x7f]
      %s1070 = scalar_lea.vmem [#allocation3], 83
      %v1071 = vld [vmem:[%s1070] ss:$2 sm:$0x7f]
      %s1072 = scalar_lea.vmem [#allocation3], 99
      %v1073 = vld [vmem:[%s1072] ss:$2 sm:$0x7f]
      %s1074 = scalar_lea.vmem [#allocation3], 115
      %v1075 = vld [vmem:[%s1074] ss:$2 sm:$0x7f]
      %v1076 = vmax.f32 %v1052, %v1061
      %v1077 = vmax.f32 %v1053, %v1063
      %v1078 = vmax.f32 %v1054, %v1065
      %v1079 = vmax.f32 %v1055, %v1067
      %v1080 = vmax.f32 %v1056, %v1069
      %v1081 = vmax.f32 %v1057, %v1071
      %v1082 = vmax.f32 %v1058, %v1073
      %v1083 = vmax.f32 %v1059, %v1075
      %1084 = vst [vmem:[%s272 + $0x1] sm:$0x7f] %v1076
      %1085 = vst [vmem:[%s272 + $0x9] sm:$0x7f] %v1077
      %1086 = vst [vmem:[%s272 + $0x11] sm:$0x7f] %v1078
      %1087 = vst [vmem:[%s272 + $0x19] sm:$0x7f] %v1079
      %1088 = vst [vmem:[%s272 + $0x21] sm:$0x7f] %v1080
      %1089 = vst [vmem:[%s272 + $0x29] sm:$0x7f] %v1081
      %1090 = vst [vmem:[%s272 + $0x31] sm:$0x7f] %v1082
      %1091 = vst [vmem:[%s272 + $0x39] sm:$0x7f] %v1083
      %s1092 = smul.u32 8, %s20
      %p1093 = scmp.lt.s32.totalorder %s19, 1
      %s1094 = scalar_select %p1093, %s19, 1
      %p1095 = scmp.lt.s32.totalorder %s1092, 7
      %s1096 = scalar_select %p1095, %s1092, 7
      %s1097 = smul.addr %s1094, 8
      %s1098 = sadd.s32 %s1096, %s1097
      %s1099 = smul.addr %s1098, 8
      %s1100 = scalar_lea.vmem %s4, %s1099
      // Predicated region
      $region37: #{thermal_module_forward.1} parent=35 // pred_check
        %p1101 = pneg %p145
      $region38: #{thermal_module_forward.1} parent=35 // pred_check_branch
        %1103 = sbr.rel (%p1101) target = $region40
      $region39: #{thermal_module_forward.1} parent=35 // pred_region
        %s1104 = smul.u32 8, %s20
      $region40: #{thermal_module_forward.1} parent=35 // pred_fallthru
        _
    $region36: #{thermal_module_forward.1} parent=5 // pred_fallthru
      _
    %p1105 = scmp.le.s32.totalorder 2, %s10
    // Predicated region
    $region41: #{thermal_module_forward.1} parent=5 // pred_check
      %p1106 = pneg %p1105
    $region42: #{thermal_module_forward.1} parent=5 // pred_check_branch
      %1108 = sbr.rel (%p1106) target = $region44
    $region43: #{thermal_module_forward.1} parent=5 // pred_region
      %s1109 = ssub.s32 %s10, 2
      // Predicated region
      $region45: #{thermal_module_forward.1} parent=43 // pred_check
        %p1110 = pneg %p151
      $region46: #{thermal_module_forward.1} parent=43 // pred_check_branch
        %1112 = sbr.rel (%p1110) target = $region48
      $region47: #{thermal_module_forward.1} parent=43 // pred_region
        %s1113 = smul.u32 8, %s22
        %p1114 = scmp.lt.s32.totalorder %s21, 1
        %s1115 = scalar_select %p1114, %s21, 1
        %p1116 = scmp.lt.s32.totalorder %s1113, 7
        %s1117 = scalar_select %p1116, %s1113, 7
        %s1118 = smul.addr %s1115, 8
        %s1119 = sadd.s32 %s1117, %s1118
        %s1120 = smul.addr %s1119, 8
        %s1121 = scalar_lea.vmem %s4, %s1120
      $region48: #{thermal_module_forward.1} parent=43 // pred_fallthru
        _
    $region44: #{thermal_module_forward.1} parent=5 // pred_fallthru
      _
  $region6: #{thermal_module_forward.1} parent=0 // loop_footer
    %s14 = sadd.s32 1, %s10
  $region7: #{thermal_module_forward.1} parent=0 // loop_footer_branch
    %9 = sbr.rel target = $region3
  $region8: #{thermal_module_forward.1} parent=0 // loop_exit
    _

</llo_original>
